<compile_context>
chip_gen: v7x
topology: tpu7x:2x2x1
jax: 0.10.0
libtpu: 0.0.40
codegen_flags: <defaults>
</compile_context>

<pallas_src>
import functools

import jax
import jax.numpy as jnp
from jax.experimental import pallas as pl
from jax.experimental.pallas import tpu as pltpu

HID = 128           # hidden width of both MLPs (lane-aligned)
LANE = 128          # TPU lane width
NEG_SLOPE = 0.01    # nn.LeakyReLU / F.leaky_relu default negative slope


def _round_up(x, m):
    return (x + m - 1) // m * m


def _leaky_relu(x):
    return jnp.where(x > 0, x, NEG_SLOPE * x)


def _ginconv_kernel(a_ref, x_ref, w1_ref, b1_ref, w2_ref, b2_ref, o_ref,
                    acc_ref, *, out_leaky):
    """One (node-tile, column-tile) grid step of a fused GINConv layer."""
    k = pl.program_id(1)

    @pl.when(k == 0)
    def _():
        acc_ref[...] = jnp.zeros_like(acc_ref)

    # A' is stored as bf16 (small exact integer counts + the 1.0 diagonal);
    # upcast in VMEM so the aggregation matches the f32 reference exactly.
    acc_ref[...] += jnp.dot(a_ref[...].astype(jnp.float32), x_ref[...],
                            preferred_element_type=jnp.float32)

    @pl.when(k == pl.num_programs(1) - 1)
    def _():
        # MLP: Linear -> LeakyReLU -> Linear (+ fused F.leaky_relu for conv1)
        h = jnp.dot(acc_ref[...], w1_ref[...],
                    preferred_element_type=jnp.float32) + b1_ref[...]
        h = _leaky_relu(h)
        out = jnp.dot(h, w2_ref[...],
                      preferred_element_type=jnp.float32) + b2_ref[...]
        if out_leaky:
            out = _leaky_relu(out)
        o_ref[...] = out.astype(o_ref.dtype)


def _vmem_limit_bytes(tile_n, tile_k, f_in, f_out):
    a_tile = 2 * tile_n * tile_k * 2                      # bf16 A', 2 buffers
    x_tile = 2 * tile_k * f_in * 4                        # f32 x col tile
    weights = 2 * (f_in * HID + HID + HID * f_out + f_out) * 4
    out_tile = 2 * tile_n * f_out * 4
    acc = tile_n * f_in * 4
    need = a_tile + x_tile + weights + out_tile + acc
    # Generous headroom; capped well under v7x's 64 MiB physical VMEM.
    return int(min(max(4 * need, 16 << 20), 48 << 20))


def _ginconv_layer(a_pad, x_pad, w1, b1, w2, b2, *, tile_n, tile_k, out_leaky):
    n_rows, n_cols = a_pad.shape
    f_in = x_pad.shape[1]
    f_out = w2.shape[1]
    grid = (n_rows // tile_n, n_cols // tile_k)           # reduction axis last
    const = lambda i, k: (0, 0)
    kernel = functools.partial(_ginconv_kernel, out_leaky=out_leaky)
    return pl.pallas_call(
        kernel,
        out_shape=jax.ShapeDtypeStruct((n_rows, f_out), jnp.float32),
        grid_spec=pltpu.PrefetchScalarGridSpec(
            num_scalar_prefetch=0,
            grid=grid,
            in_specs=[
                pl.BlockSpec((tile_n, tile_k), lambda i, k: (i, k)),  # A' tile (bf16)
                pl.BlockSpec((tile_k, f_in), lambda i, k: (k, 0)),    # x column tile
                pl.BlockSpec((f_in, HID), const),                     # W1 (resident)
                pl.BlockSpec((1, HID), const),                        # b1
                pl.BlockSpec((HID, f_out), const),                    # W2 (resident)
                pl.BlockSpec((1, f_out), const),                      # b2
            ],
            out_specs=pl.BlockSpec((tile_n, f_out), lambda i, k: (i, 0)),
            scratch_shapes=[pltpu.VMEM((tile_n, f_in), jnp.float32)],
        ),
        compiler_params=pltpu.CompilerParams(
            dimension_semantics=("parallel", "arbitrary"),
            vmem_limit_bytes=_vmem_limit_bytes(tile_n, tile_k, f_in, f_out)),
    )(a_pad, x_pad, w1, b1, w2, b2)


def _choose_tiles(num_nodes, tile_n, tile_k):
    # Columns (contraction axis): lane-aligned padding only (multiple of 128),
    # with the largest column tile <= tile_k that divides it.
    n_cols = _round_up(num_nodes, LANE)
    tk = LANE
    for cand in range(min(tile_k, n_cols), LANE - 1, -LANE):
        if n_cols % cand == 0:
            tk = cand
            break
    # Rows (node tiles): multiple of 16 (bf16 sublane packing of A') and
    # clamped so the node-axis grid has >= 2 steps (both v7x TensorCores).
    tn = min(tile_n, _round_up(-(-num_nodes // 2), 16))
    tn = max(16, _round_up(tn, 16))
    n_rows = _round_up(num_nodes, tn)
    return tn, tk, n_rows, n_cols


def prepare_graph(edge_index, num_nodes, *, tile_n=256, tile_k=512, eps=0.0):
    """Builds the dense bf16 GIN operator A' = A + (1+eps)*I once per graph.

    Hoisted out of the forward pass so the O(N^2) scatter (and the bf16 cast)
    is not re-materialized on every call; reuse the returned tuple across
    forward passes on the same graph.
    """
    tn, tk, n_rows, n_cols = _choose_tiles(num_nodes, tile_n, tile_k)
    src, dst = edge_index[0], edge_index[1]
    diag = jnp.arange(num_nodes)
    a = jnp.zeros((n_rows, n_cols), jnp.float32)
    a = a.at[dst, src].add(1.0)            # sum aggregation over in-edges
    a = a.at[diag, diag].add(1.0 + eps)    # (1+eps) * x_i self term folded in
    # Edge multiplicities (and 1+eps with eps=0) are exact in bf16 up to 256.
    return a.astype(jnp.bfloat16), (tn, tk, n_rows, n_cols)


def _fit_rows(h, rows):
    n = h.shape[0]
    if n == rows:
        return h
    if n > rows:
        return h[:rows]
    return jnp.pad(h, ((0, rows - n), (0, 0)))


def gin_forward(x, edge_index, params, *, tile_n=256, tile_k=512, eps=0.0,
                graph=None):
    """GIN forward pass (eval mode).

    x:          (N, m + 2) float32 node features
    edge_index: (2, E) int32; row 0 = source, row 1 = target
    params:     ((w11,b11,w12,b12), (w21,b21,w22,b22)) with
                w11:(m+2,128) w12:(128,128) w21:(128,128) w22:(128,100)
    graph:      optional result of prepare_graph(...) (cache across calls)
    returns:    (N, 100) float32
    """
    (w11, b11, w12, b12), (w21, b21, w22, b22) = params
    N, in_dim = x.shape
    out_dim = w22.shape[1]
    assert in_dim <= LANE and out_dim <= LANE

    if graph is None:
        graph = prepare_graph(edge_index, N, tile_n=tile_n, tile_k=tile_k,
                              eps=eps)
    a_pad, (tn, tk, n_rows, n_cols) = graph

    # Lane-pad features / narrow weight dims to 128.
    x_pad = jnp.zeros((n_cols, LANE), jnp.float32).at[:N, :in_dim].set(x)
    w11_p = jnp.zeros((LANE, HID), jnp.float32).at[:in_dim, :].set(w11)
    w22_p = jnp.zeros((HID, LANE), jnp.float32).at[:, :out_dim].set(w22)
    b11_p = b11.reshape(1, HID)
    b12_p = b12.reshape(1, HID)
    b21_p = b21.reshape(1, HID)
    b22_p = jnp.zeros((1, LANE), jnp.float32).at[0, :out_dim].set(b22)

    # conv1 + fused F.leaky_relu
    h = _ginconv_layer(a_pad, x_pad, w11_p, b11_p, w12, b12_p,
                       tile_n=tn, tile_k=tk, out_leaky=True)
    # TODO(synk): F.dropout(training=True) not implemented; eval-mode identity.
    # conv2 (junk in padded rows >= N is inert: A's padded columns are zero)
    h = _fit_rows(h, n_cols)
    out = _ginconv_layer(a_pad, h, w21, b21_p, w22_p, b22_p,
                         tile_n=tn, tile_k=tk, out_leaky=False)
    return out[:N, :out_dim]


def init_params(key, m):
    """Mimics the PyTorch module: Linear weights ~ N(0, 0.001) (init_weights),
    biases keep nn.Linear default U(+-1/sqrt(fan_in))."""
    dims = [(m + 2, 128), (128, 128), (128, 128), (128, 100)]
    flat = []
    for fan_in, fan_out in dims:
        key, kw, kb = jax.random.split(key, 3)
        w = 0.001 * jax.random.normal(kw, (fan_in, fan_out), jnp.float32)
        bound = 1.0 / jnp.sqrt(fan_in)
        b = jax.random.uniform(kb, (fan_out,), jnp.float32, -bound, bound)
        flat.append((w, b))
    (w11, b11), (w12, b12), (w21, b21), (w22, b22) = flat
    return ((w11, b11, w12, b12), (w21, b21, w22, b22))


def gin_reference(x, edge_index, params, eps=0.0):
    """Pure-JAX reference (scatter-add aggregation)."""
    (w11, b11, w12, b12), (w21, b21, w22, b22) = params
    src, dst = edge_index[0], edge_index[1]

    def agg(h):
        return jnp.zeros_like(h).at[dst].add(h[src])

    def mlp(h, w1, b1, w2, b2):
        h = h @ w1 + b1
        h = jnp.where(h > 0, h, NEG_SLOPE * h)
        return h @ w2 + b2

    h = mlp((1.0 + eps) * x + agg(x), w11, b11, w12, b12)
    h = jnp.where(h > 0, h, NEG_SLOPE * h)          # F.leaky_relu
    h = mlp((1.0 + eps) * h + agg(h), w21, b21, w22, b22)  # dropout = identity
    return h


if __name__ == "__main__":
    key = jax.random.PRNGKey(0)
    m = 6                       # GIN(m): in_channels = m + 2 = 8
    N, E = 64, 256              # small graph: 64 nodes, 256 edges

    key, kp, kx, ke = jax.random.split(key, 4)
    params = init_params(kp, m)
    x = jax.random.normal(kx, (N, m + 2), jnp.float32)
    edge_index = jax.random.randint(ke, (2, E), 0, N, dtype=jnp.int32)

    # Dense bf16 adjacency built once per graph and reused across calls.
    graph = prepare_graph(edge_index, N)
    y = gin_forward(x, edge_index, params, graph=graph)
    y = jax.block_until_ready(y)

    y_ref = gin_reference(x, edge_index, params)
    assert y.shape == (N, 100)
    max_err = float(jnp.max(jnp.abs(y - y_ref)))
    assert jnp.allclose(y, y_ref, atol=1e-4, rtol=1e-4), max_err

    print("KERNEL_OK")
</pallas_src>

<mosaic_0001>
module attributes {stable_mosaic.version = 11 : i64} {
  func.func @_ginconv_kernel(%arg0: i32, %arg1: i32, %arg2: memref<32x128xbf16, #tpu.memory_space<vmem>>, %arg3: memref<128x128xf32, #tpu.memory_space<vmem>>, %arg4: memref<128x128xf32, #tpu.memory_space<vmem>>, %arg5: memref<1x128xf32, #tpu.memory_space<vmem>>, %arg6: memref<128x128xf32, #tpu.memory_space<vmem>>, %arg7: memref<1x128xf32, #tpu.memory_space<vmem>>, %arg8: memref<32x128xf32, #tpu.memory_space<vmem>>, %arg9: memref<32x128xf32, #tpu.memory_space<vmem>>) attributes {dimension_semantics = [#tpu.dimension_semantics<parallel>, #tpu.dimension_semantics<arbitrary>], iteration_bounds = array<i64: 2, 1>, scalar_prefetch = 0 : i64, scratch_operands = 1 : i64, tpu.core_type = #tpu.core_type<tc>, window_params = [{transform_indices = @transform_0, window_bounds = array<i64: 32, 128>}, {transform_indices = @transform_1, window_bounds = array<i64: 128, 128>}, {pipeline_mode = #tpu.pipeline_mode<synchronous>, transform_indices = @transform_2, window_bounds = array<i64: 128, 128>}, {pipeline_mode = #tpu.pipeline_mode<synchronous>, transform_indices = @transform_3, window_bounds = array<i64: 1, 128>}, {pipeline_mode = #tpu.pipeline_mode<synchronous>, transform_indices = @transform_4, window_bounds = array<i64: 128, 128>}, {pipeline_mode = #tpu.pipeline_mode<synchronous>, transform_indices = @transform_5, window_bounds = array<i64: 1, 128>}, {transform_indices = @transform_6, window_bounds = array<i64: 32, 128>}]} {
    %c0_i32 = arith.constant 0 : i32
    %0 = arith.cmpi eq, %arg1, %c0_i32 : i32
    %1 = arith.extui %0 : i1 to i32
    %c0_i32_0 = arith.constant 0 : i32
    %2 = arith.cmpi ne, %1, %c0_i32_0 : i32
    scf.if %2 {
      %cst_10 = arith.constant 0.000000e+00 : f32
      %13 = vector.broadcast %cst_10 : f32 to vector<32x128xf32>
      %c0_11 = arith.constant 0 : index
      %c0_12 = arith.constant 0 : index
      %14 = vector.load %arg9[%c0_11, %c0_12] : memref<32x128xf32, #tpu.memory_space<vmem>>, vector<32x128xf32>
      tpu.vector_store %arg9[%c0_11, %c0_12], %13 {strides = array<i32>} : memref<32x128xf32, #tpu.memory_space<vmem>>, vector<32x128xf32>,
    } else {
    }
    %c0 = arith.constant 0 : index
    %c0_1 = arith.constant 0 : index
    %3 = vector.load %arg9[%c0, %c0_1] : memref<32x128xf32, #tpu.memory_space<vmem>>, vector<32x128xf32>
    %c0_2 = arith.constant 0 : index
    %c0_3 = arith.constant 0 : index
    %4 = vector.load %arg2[%c0_2, %c0_3] : memref<32x128xbf16, #tpu.memory_space<vmem>>, vector<32x128xbf16>
    %5 = arith.extf %4 : vector<32x128xbf16> to vector<32x128xf32>
    %c0_4 = arith.constant 0 : index
    %c0_5 = arith.constant 0 : index
    %6 = vector.load %arg3[%c0_4, %c0_5] : memref<128x128xf32, #tpu.memory_space<vmem>>, vector<128x128xf32>
    %cst = arith.constant dense<0.000000e+00> : vector<32x128xf32>
    %7 = tpu.matmul %5, %6, %cst {dimension_numbers = #tpu.dot_dimension_numbers<[1], [0], [0], [1], [0, 0, 1, 1], [], []>} : vector<32x128xf32>, vector<128x128xf32>, vector<32x128xf32> -> vector<32x128xf32>
    %8 = arith.addf %3, %7 : vector<32x128xf32>
    %c0_6 = arith.constant 0 : index
    %c0_7 = arith.constant 0 : index
    %9 = vector.load %arg9[%c0_6, %c0_7] : memref<32x128xf32, #tpu.memory_space<vmem>>, vector<32x128xf32>
    tpu.vector_store %arg9[%c0_6, %c0_7], %8 {strides = array<i32>} : memref<32x128xf32, #tpu.memory_space<vmem>>, vector<32x128xf32>,
    %c0_i32_8 = arith.constant 0 : i32
    %10 = arith.cmpi eq, %arg1, %c0_i32_8 : i32
    %11 = arith.extui %10 : i1 to i32
    %c0_i32_9 = arith.constant 0 : i32
    %12 = arith.cmpi ne, %11, %c0_i32_9 : i32
    scf.if %12 {
      %c0_10 = arith.constant 0 : index
      %c0_11 = arith.constant 0 : index
      %13 = vector.load %arg9[%c0_10, %c0_11] : memref<32x128xf32, #tpu.memory_space<vmem>>, vector<32x128xf32>
      %c0_12 = arith.constant 0 : index
      %c0_13 = arith.constant 0 : index
      %14 = vector.load %arg4[%c0_12, %c0_13] : memref<128x128xf32, #tpu.memory_space<vmem>>, vector<128x128xf32>
      %cst_14 = arith.constant dense<0.000000e+00> : vector<32x128xf32>
      %15 = tpu.matmul %13, %14, %cst_14 {dimension_numbers = #tpu.dot_dimension_numbers<[1], [0], [0], [1], [0, 0, 1, 1], [], []>} : vector<32x128xf32>, vector<128x128xf32>, vector<32x128xf32> -> vector<32x128xf32>
      %c0_15 = arith.constant 0 : index
      %c0_16 = arith.constant 0 : index
      %16 = vector.load %arg5[%c0_15, %c0_16] : memref<1x128xf32, #tpu.memory_space<vmem>>, vector<1x128xf32>
      %17 = vector.broadcast %16 : vector<1x128xf32> to vector<32x128xf32>
      %18 = arith.addf %15, %17 : vector<32x128xf32>
      %cst_17 = arith.constant 0.000000e+00 : f32
      %19 = vector.broadcast %cst_17 : f32 to vector<32x128xf32>
      %20 = arith.cmpf ogt, %18, %19 : vector<32x128xf32>
      %cst_18 = arith.constant 0.00999999977 : f32
      %21 = vector.broadcast %cst_18 : f32 to vector<32x128xf32>
      %22 = arith.mulf %21, %18 : vector<32x128xf32>
      %23 = arith.select %20, %18, %22 : vector<32x128xi1>, vector<32x128xf32>
      %c0_19 = arith.constant 0 : index
      %c0_20 = arith.constant 0 : index
      %24 = vector.load %arg6[%c0_19, %c0_20] : memref<128x128xf32, #tpu.memory_space<vmem>>, vector<128x128xf32>
      %cst_21 = arith.constant dense<0.000000e+00> : vector<32x128xf32>
      %25 = tpu.matmul %23, %24, %cst_21 {dimension_numbers = #tpu.dot_dimension_numbers<[1], [0], [0], [1], [0, 0, 1, 1], [], []>} : vector<32x128xf32>, vector<128x128xf32>, vector<32x128xf32> -> vector<32x128xf32>
      %c0_22 = arith.constant 0 : index
      %c0_23 = arith.constant 0 : index
      %26 = vector.load %arg7[%c0_22, %c0_23] : memref<1x128xf32, #tpu.memory_space<vmem>>, vector<1x128xf32>
      %27 = vector.broadcast %26 : vector<1x128xf32> to vector<32x128xf32>
      %28 = arith.addf %25, %27 : vector<32x128xf32>
      %cst_24 = arith.constant 0.000000e+00 : f32
      %29 = vector.broadcast %cst_24 : f32 to vector<32x128xf32>
      %30 = arith.cmpf ogt, %28, %29 : vector<32x128xf32>
      %cst_25 = arith.constant 0.00999999977 : f32
      %31 = vector.broadcast %cst_25 : f32 to vector<32x128xf32>
      %32 = arith.mulf %31, %28 : vector<32x128xf32>
      %33 = arith.select %30, %28, %32 : vector<32x128xi1>, vector<32x128xf32>
      %c0_26 = arith.constant 0 : index
      %c0_27 = arith.constant 0 : index
      %34 = vector.load %arg8[%c0_26, %c0_27] : memref<32x128xf32, #tpu.memory_space<vmem>>, vector<32x128xf32>
      tpu.vector_store %arg8[%c0_26, %c0_27], %33 {strides = array<i32>} : memref<32x128xf32, #tpu.memory_space<vmem>>, vector<32x128xf32>,
    } else {
    }
    return
  }
  func.func @transform_0(%arg0: i32, %arg1: i32) -> (i32, i32) {
    %c0_i32 = arith.constant 0 : i32
    return %arg0, %arg1 : i32, i32
  }
  func.func @transform_1(%arg0: i32, %arg1: i32) -> (i32, i32) {
    %c0_i32 = arith.constant 0 : i32
    %c0_i32_0 = arith.constant 0 : i32
    return %arg1, %c0_i32 : i32, i32
  }
  func.func @transform_2(%arg0: i32, %arg1: i32) -> (i32, i32) {
    %c0_i32 = arith.constant 0 : i32
    %c0_i32_0 = arith.constant 0 : i32
    %c0_i32_1 = arith.constant 0 : i32
    return %c0_i32, %c0_i32_0 : i32, i32
  }
  func.func @transform_3(%arg0: i32, %arg1: i32) -> (i32, i32) {
    %c0_i32 = arith.constant 0 : i32
    %c0_i32_0 = arith.constant 0 : i32
    %c0_i32_1 = arith.constant 0 : i32
    return %c0_i32, %c0_i32_0 : i32, i32
  }
  func.func @transform_4(%arg0: i32, %arg1: i32) -> (i32, i32) {
    %c0_i32 = arith.constant 0 : i32
    %c0_i32_0 = arith.constant 0 : i32
    %c0_i32_1 = arith.constant 0 : i32
    return %c0_i32, %c0_i32_0 : i32, i32
  }
  func.func @transform_5(%arg0: i32, %arg1: i32) -> (i32, i32) {
    %c0_i32 = arith.constant 0 : i32
    %c0_i32_0 = arith.constant 0 : i32
    %c0_i32_1 = arith.constant 0 : i32
    return %c0_i32, %c0_i32_0 : i32, i32
  }
  func.func @transform_6(%arg0: i32, %arg1: i32) -> (i32, i32) {
    %c0_i32 = arith.constant 0 : i32
    %c0_i32_0 = arith.constant 0 : i32
    return %arg0, %c0_i32 : i32, i32
  }
}

</mosaic_0001>

<llo_original>
// kernel: tpu_custom_call.1
$region0: #{tpu_custom_call.1}
  #allocation0 [shape = 'u32[]', space=smem, size = 0x4, offset = 0x4, fixed_abs, tag = 'smem constant byte address 0x4 - core index']
  #allocation1 [shape = 'u32[144,128]{1,0:T(1,128)}', space=vmem, size = 0x12000, scoped, tag = 'internal scratch']
  #allocation2 [shape = 'f32[32,128]{1,0:T(8,128)}', space=vmem, size = 0x4000, scoped, tag = 'scratch operand']
  %s0 = inlined_call_operand.hbm [shape: bf16[64,128], index: 0, kind: input, shape index: {}]
  %s1 = inlined_call_operand.hbm [shape: f32[128,128], index: 1, kind: input, shape index: {}]
  %s2 = inlined_call_operand.hbm [shape: f32[128,128], index: 2, kind: input, shape index: {}]
  %s3 = inlined_call_operand.vmem [shape: f32[1,128], index: 3, kind: input, shape index: {}]
  %s4 = inlined_call_operand.hbm [shape: f32[128,128], index: 4, kind: input, shape index: {}]
  %s5 = inlined_call_operand.vmem [shape: f32[1,128], index: 5, kind: input, shape index: {}]
  %s6 = inlined_call_operand.hbm [shape: f32[64,128], index: 6, kind: output, shape index: {}]
  %s7 = sld [smem:[#allocation0]]
  $region81: #{tpu_custom_call.1} parent=0
    _
  %s9 = ssub.s32 1, %s7
  %s10 = scalar_select 0, %s9, %s7
  $region1: #{tpu_custom_call.1} parent=0
    #allocation3 [shape = 'u8[16384]{0}', space=vmem, size = 0x4000, scoped, tag = 'input window, operand 0']
    #allocation4 [shape = 's32[2]{0}', space=sflag, size = 0x8, scoped, tag = 'scoped memory for tpu_custom_call.1']
    #allocation5 [shape = 's32[2]{0}', space=sflag, size = 0x8, scoped, tag = 'scoped memory for tpu_custom_call.1']
    #allocation6 [shape = 'u8[65536]{0}', space=vmem, size = 0x10000, scoped, tag = 'input window, operand 1, single buffered']
    #allocation7 [shape = 's32[1]{0}', space=sflag, size = 0x4, scoped, tag = 'scoped memory for tpu_custom_call.1']
    #allocation8 [shape = 'u8[65536]{0}', space=vmem, size = 0x10000, scoped, tag = 'input window, operand 2, single buffered']
    #allocation9 [shape = 'u8[65536]{0}', space=vmem, size = 0x10000, scoped, tag = 'input window, operand 4, single buffered']
    #allocation10 [shape = 's32[1]{0}', space=sflag, size = 0x4, scoped, tag = 'scoped memory for tpu_custom_call.1']
    #allocation11 [shape = 'u8[32768]{0}', space=vmem, size = 0x8000, scoped, tag = 'output window, operand 0']
    %11 = vsyncpa [#allocation4], 0
    %s12 = scalar_lea.sflag [#allocation4], 1
    %13 = vsyncpa %s12, 0
    %14 = vsyncpa [#allocation7], 0
    %15 = vsyncpa [#allocation10], 0
    %16 = vsyncpa [#allocation5], 0
    %s17 = scalar_lea.sflag [#allocation5], 1
    %18 = vsyncpa %s17, 0
    loop: start=0, step=1, limit=4
    $region2: #{tpu_custom_call.1} parent=1 // loop_pre_header
      _
    $region3: #{tpu_custom_call.1} parent=1 // loop_header
      %s20 = sphi 0, %s24
      %p21 = scmp.ge.s32.totalorder %s20, 4
      %s27 = sphi 0, %s39
      %s28 = sphi 0, %s35
      %s29 = sphi 0, %s27
      %s30 = sphi 0, %s28
      %s31 = sphi 0, %s29
      %s32 = sphi 0, %s30
      %s44 = sphi 0, %s46
      %s47 = sphi 0, %s44
      %s48 = sphi 0, %s47
      %s64 = sphi 0, %s48
      %s70 = sphi 0, %s72
      %s73 = sphi 0, %s70
      %s74 = sphi 0, %s73
      %s90 = sphi 0, %s74
      %s94 = sphi 0, %s94
      %s96 = sphi 0, %s94
      %s97 = sphi 0, %s96
      %s111 = sphi 0, %s97
      %s115 = sphi 0, %s115
      %s117 = sphi 0, %s115
      %s118 = sphi 0, %s117
      %s132 = sphi 0, %s118
      %s136 = sphi 0, %s136
      %s138 = sphi 0, %s136
      %s139 = sphi 0, %s138
      %s153 = sphi 0, %s139
      %s157 = sphi 0, %s157
      %s159 = sphi 0, %s157
      %s160 = sphi 0, %s159
      %s174 = sphi 0, %s160
      %s180 = sphi 0, %s182
      %s183 = sphi 0, %s180
      %s184 = sphi 0, %s183
      %s200 = sphi 0, %s184
    $region4: #{tpu_custom_call.1} parent=1 // loop_header_branch
      %23 = sbr.rel (%p21) target = $region8
    $region5: #{tpu_custom_call.1} parent=1 // loop_body
      %s25 = ssub.s32 %s20, 1
      %s26 = ssub.s32 %s20, 2
      %s33 = sadd.s32 1, %s28
      %p34 = scmp.ge.s32.totalorder %s33, 1
      %s35 = scalar_select %p34, 0, %s33
      %s36 = sadd.s32 1, %s27
      %s37 = scalar_select %p34, %s36, %s27
      %p38 = scmp.ge.s32.totalorder %s37, 2
      %s39 = scalar_select %p38, 0, %s37
      %s40 = ssub.s32 %s27, %s39
      %s41 = ssub.s32 %s28, %s35
      %s42 = sor.u32 %s40, %s41
      %p43 = scmp.eq.s32.totalorder %s42, 0
      %s45 = sadd.s32 %s44, 1
      %s46 = scalar_select %p43, %s44, %s45
      %p49 = pneg %p43
      %p50 = scmp.eq.s32.totalorder %s20, 1
      %p51 = por %p49, %p50
      %p52 = scmp.ne.s32.totalorder %s44, %s47
      %p53 = scmp.eq.s32.totalorder %s20, 0
      %p54 = por %p52, %p53
      %p55 = scmp.ne.s32.totalorder %s44, %s47
      %p56 = scmp.eq.s32.totalorder %s25, 1
      %p57 = por %p55, %p56
      %p58 = scmp.ne.s32.totalorder %s47, %s48
      %p59 = scmp.eq.s32.totalorder %s25, 0
      %p60 = por %p58, %p59
      %p61 = scmp.ne.s32.totalorder %s47, %s48
      %p62 = scmp.eq.s32.totalorder %s26, 1
      %p63 = por %p61, %p62
      %p65 = scmp.ne.s32.totalorder %s48, %s64
      %p66 = scmp.eq.s32.totalorder %s26, 0
      %p67 = por %p65, %p66
      %s68 = ssub.s32 %s28, %s35
      %p69 = scmp.eq.s32.totalorder %s68, 0
      %s71 = sadd.s32 %s70, 1
      %s72 = scalar_select %p69, %s70, %s71
      %p75 = pneg %p69
      %p76 = scmp.eq.s32.totalorder %s20, 1
      %p77 = por %p75, %p76
      %p78 = scmp.ne.s32.totalorder %s70, %s73
      %p79 = scmp.eq.s32.totalorder %s20, 0
      %p80 = por %p78, %p79
      %p81 = scmp.ne.s32.totalorder %s70, %s73
      %p82 = scmp.eq.s32.totalorder %s25, 1
      %p83 = por %p81, %p82
      %p84 = scmp.ne.s32.totalorder %s73, %s74
      %p85 = scmp.eq.s32.totalorder %s25, 0
      %p86 = por %p84, %p85
      %p87 = scmp.ne.s32.totalorder %s73, %s74
      %p88 = scmp.eq.s32.totalorder %s26, 1
      %p89 = por %p87, %p88
      %p91 = scmp.ne.s32.totalorder %s74, %s90
      %p92 = scmp.eq.s32.totalorder %s26, 0
      %p93 = por %p91, %p92
      %s95 = sadd.s32 %s94, 1
      %p98 = scmp.eq.s32.totalorder %s20, 1
      %p99 = scmp.ne.s32.totalorder %s94, %s96
      %p100 = scmp.eq.s32.totalorder %s20, 0
      %p101 = por %p99, %p100
      %p102 = scmp.ne.s32.totalorder %s94, %s96
      %p103 = scmp.eq.s32.totalorder %s25, 1
      %p104 = por %p102, %p103
      %p105 = scmp.ne.s32.totalorder %s96, %s97
      %p106 = scmp.eq.s32.totalorder %s25, 0
      %p107 = por %p105, %p106
      %p108 = scmp.ne.s32.totalorder %s96, %s97
      %p109 = scmp.eq.s32.totalorder %s26, 1
      %p110 = por %p108, %p109
      %p112 = scmp.ne.s32.totalorder %s97, %s111
      %p113 = scmp.eq.s32.totalorder %s26, 0
      %p114 = por %p112, %p113
      %s116 = sadd.s32 %s115, 1
      %p119 = scmp.eq.s32.totalorder %s20, 1
      %p120 = scmp.ne.s32.totalorder %s115, %s117
      %p121 = scmp.eq.s32.totalorder %s20, 0
      %p122 = por %p120, %p121
      %p123 = scmp.ne.s32.totalorder %s115, %s117
      %p124 = scmp.eq.s32.totalorder %s25, 1
      %p125 = por %p123, %p124
      %p126 = scmp.ne.s32.totalorder %s117, %s118
      %p127 = scmp.eq.s32.totalorder %s25, 0
      %p128 = por %p126, %p127
      %p129 = scmp.ne.s32.totalorder %s117, %s118
      %p130 = scmp.eq.s32.totalorder %s26, 1
      %p131 = por %p129, %p130
      %p133 = scmp.ne.s32.totalorder %s118, %s132
      %p134 = scmp.eq.s32.totalorder %s26, 0
      %p135 = por %p133, %p134
      %s137 = sadd.s32 %s136, 1
      %p140 = scmp.eq.s32.totalorder %s20, 1
      %p141 = scmp.ne.s32.totalorder %s136, %s138
      %p142 = scmp.eq.s32.totalorder %s20, 0
      %p143 = por %p141, %p142
      %p144 = scmp.ne.s32.totalorder %s136, %s138
      %p145 = scmp.eq.s32.totalorder %s25, 1
      %p146 = por %p144, %p145
      %p147 = scmp.ne.s32.totalorder %s138, %s139
      %p148 = scmp.eq.s32.totalorder %s25, 0
      %p149 = por %p147, %p148
      %p150 = scmp.ne.s32.totalorder %s138, %s139
      %p151 = scmp.eq.s32.totalorder %s26, 1
      %p152 = por %p150, %p151
      %p154 = scmp.ne.s32.totalorder %s139, %s153
      %p155 = scmp.eq.s32.totalorder %s26, 0
      %p156 = por %p154, %p155
      %s158 = sadd.s32 %s157, 1
      %p161 = scmp.eq.s32.totalorder %s20, 1
      %p162 = scmp.ne.s32.totalorder %s157, %s159
      %p163 = scmp.eq.s32.totalorder %s20, 0
      %p164 = por %p162, %p163
      %p165 = scmp.ne.s32.totalorder %s157, %s159
      %p166 = scmp.eq.s32.totalorder %s25, 1
      %p167 = por %p165, %p166
      %p168 = scmp.ne.s32.totalorder %s159, %s160
      %p169 = scmp.eq.s32.totalorder %s25, 0
      %p170 = por %p168, %p169
      %p171 = scmp.ne.s32.totalorder %s159, %s160
      %p172 = scmp.eq.s32.totalorder %s26, 1
      %p173 = por %p171, %p172
      %p175 = scmp.ne.s32.totalorder %s160, %s174
      %p176 = scmp.eq.s32.totalorder %s26, 0
      %p177 = por %p175, %p176
      %s178 = ssub.s32 %s27, %s39
      %p179 = scmp.eq.s32.totalorder %s178, 0
      %s181 = sadd.s32 %s180, 1
      %s182 = scalar_select %p179, %s180, %s181
      %p185 = pneg %p179
      %p186 = scmp.eq.s32.totalorder %s20, 1
      %p187 = por %p185, %p186
      %p188 = scmp.ne.s32.totalorder %s180, %s183
      %p189 = scmp.eq.s32.totalorder %s20, 0
      %p190 = por %p188, %p189
      %p191 = scmp.ne.s32.totalorder %s180, %s183
      %p192 = scmp.eq.s32.totalorder %s25, 1
      %p193 = por %p191, %p192
      %p194 = scmp.ne.s32.totalorder %s183, %s184
      %p195 = scmp.eq.s32.totalorder %s25, 0
      %p196 = por %p194, %p195
      %p197 = scmp.ne.s32.totalorder %s183, %s184
      %p198 = scmp.eq.s32.totalorder %s26, 1
      %p199 = por %p197, %p198
      %p201 = scmp.ne.s32.totalorder %s184, %s200
      %p202 = scmp.eq.s32.totalorder %s26, 0
      %p203 = por %p201, %p202
      %p204 = scmp.le.s32.totalorder 1, %s20
      %p205 = scmp.lt.s32.totalorder %s20, 3
      %p206 = pnand %p204, %p205
      %p207 = pneg %p206
      // Predicated region
      $region9: #{tpu_custom_call.1} parent=5 // pred_check
        _
      $region10: #{tpu_custom_call.1} parent=5 // pred_check_branch
        %209 = sbr.rel (%p206) target = $region12
      $region11: #{tpu_custom_call.1} parent=5 // pred_region
        %s210 = ssub.s32 %s20, 1
        // Predicated region
        $region13: #{tpu_custom_call.1} parent=11 // pred_check
          %p211 = pneg %p86
        $region14: #{tpu_custom_call.1} parent=11 // pred_check_branch
          %213 = sbr.rel (%p211) target = $region16
        $region15: #{tpu_custom_call.1} parent=11 // pred_region
          %s214 = smul.u32 16, %s30
          %s216 = ssub.s32 2048, 2048
          %217 = vsyncadd [#allocation7], %s216
          %s218 = smul.addr %s214, 128
          %s219 = scalar_lea.hbm %s1, %s218
          %s220 = sshll.u32 [#allocation6], 4
          %s221 = int_to_ptr.vmem [resolvable:$true] %s220
          %226 = dma.hbm_to_vmem [thread:$0]  %s219, 2048, %s221, [#allocation7], 128, 128, 8
        $region16: #{tpu_custom_call.1} parent=11 // pred_fallthru
          _
        // Predicated region
        $region17: #{tpu_custom_call.1} parent=11 // pred_check
          %p227 = pneg %p107
        $region18: #{tpu_custom_call.1} parent=11 // pred_check_branch
          %229 = sbr.rel (%p227) target = $region20
        $region19: #{tpu_custom_call.1} parent=11 // pred_region
          %s231 = ssub.s32 2048, 2048
          %232 = vsyncadd [#allocation7], %s231
          %s233 = sshll.u32 [#allocation8], 4
          %s234 = int_to_ptr.vmem [resolvable:$true] %s233
          %239 = dma.hbm_to_vmem [thread:$0]  %s2, 2048, %s234, [#allocation7], 128, 128, 8
        $region20: #{tpu_custom_call.1} parent=11 // pred_fallthru
          _
        // Predicated region
        $region21: #{tpu_custom_call.1} parent=11 // pred_check
          %p240 = pneg %p128
        $region22: #{tpu_custom_call.1} parent=11 // pred_check_branch
          %242 = sbr.rel (%p240) target = $region24
        $region23: #{tpu_custom_call.1} parent=11 // pred_region
          _
        $region24: #{tpu_custom_call.1} parent=11 // pred_fallthru
          _
        // Predicated region
        $region25: #{tpu_custom_call.1} parent=11 // pred_check
          %p243 = pneg %p149
        $region26: #{tpu_custom_call.1} parent=11 // pred_check_branch
          %245 = sbr.rel (%p243) target = $region28
        $region27: #{tpu_custom_call.1} parent=11 // pred_region
          %s247 = ssub.s32 2048, 2048
          %248 = vsyncadd [#allocation10], %s247
          %s249 = sshll.u32 [#allocation9], 4
          %s250 = int_to_ptr.vmem [resolvable:$true] %s249
          %255 = dma.hbm_to_vmem [thread:$0]  %s4, 2048, %s250, [#allocation10], 128, 128, 8
        $region28: #{tpu_custom_call.1} parent=11 // pred_fallthru
          _
        // Predicated region
        $region29: #{tpu_custom_call.1} parent=11 // pred_check
          %p256 = pneg %p170
        $region30: #{tpu_custom_call.1} parent=11 // pred_check_branch
          %258 = sbr.rel (%p256) target = $region32
        $region31: #{tpu_custom_call.1} parent=11 // pred_region
          _
        $region32: #{tpu_custom_call.1} parent=11 // pred_fallthru
          _
      $region12: #{tpu_custom_call.1} parent=5 // pred_fallthru
        _
      %p259 = scmp.lt.s32.totalorder %s20, 2
      // Predicated region
      $region33: #{tpu_custom_call.1} parent=5 // pred_check
        %p260 = pneg %p259
      $region34: #{tpu_custom_call.1} parent=5 // pred_check_branch
        %262 = sbr.rel (%p260) target = $region36
      $region35: #{tpu_custom_call.1} parent=5 // pred_region
        // Predicated region
        $region37: #{tpu_custom_call.1} parent=35 // pred_check
          %p263 = pneg %p54
        $region38: #{tpu_custom_call.1} parent=35 // pred_check_branch
          %265 = sbr.rel (%p263) target = $region40
        $region39: #{tpu_custom_call.1} parent=35 // pred_region
          %s266 = sand.u32 %s44, 1
          %s267 = scalar_lea.sflag [#allocation4], %s266
          %s268 = sand.u32 %s44, 1
          %s269 = smul.addr %s268, 16
          %s270 = scalar_lea.vmem [#allocation3], %s269
          %s271 = smul.u32 4, %s27
          %s273 = ssub.s32 256, 256
          %274 = vsyncadd %s267, %s273
          %s275 = sadd.s32 %s28, %s271
          %s276 = smul.addr %s275, 64
          %s277 = scalar_lea.hbm %s0, %s276
          %s278 = sshll.u32 %s270, 4
          %s279 = int_to_ptr.vmem [resolvable:$true] %s278
          %284 = dma.hbm_to_vmem [thread:$0]  %s277, 256, %s279, %s267, 64, 64, 4
        $region40: #{tpu_custom_call.1} parent=35 // pred_fallthru
          _
      $region36: #{tpu_custom_call.1} parent=5 // pred_fallthru
        _
      %p285 = scmp.le.s32.totalorder 1, %s20
      %p286 = scmp.lt.s32.totalorder %s20, 3
      %p287 = pnand %p285, %p286
      %p288 = pneg %p287
      // Predicated region
      $region41: #{tpu_custom_call.1} parent=5 // pred_check
        _
      $region42: #{tpu_custom_call.1} parent=5 // pred_check_branch
        %290 = sbr.rel (%p287) target = $region44
      $region43: #{tpu_custom_call.1} parent=5 // pred_region
        %s291 = ssub.s32 %s20, 1
        %s292 = sand.u32 %s47, 1
        %s293 = scalar_lea.sflag [#allocation4], %s292
        %s294 = sand.u32 %s47, 1
        %s295 = smul.addr %s294, 16
        %s296 = scalar_lea.vmem [#allocation3], %s295
        // Predicated region
        $region45: #{tpu_custom_call.1} parent=43 // pred_check
          %p297 = pneg %p60
        $region46: #{tpu_custom_call.1} parent=43 // pred_check_branch
          %299 = sbr.rel (%p297) target = $region48
        $region47: #{tpu_custom_call.1} parent=43 // pred_region
          %300 = dma.done %s293, 256
        $region48: #{tpu_custom_call.1} parent=43 // pred_fallthru
          _
        // Predicated region
        $region49: #{tpu_custom_call.1} parent=43 // pred_check
          %p301 = pneg %p86
        $region50: #{tpu_custom_call.1} parent=43 // pred_check_branch
          %303 = sbr.rel (%p301) target = $region52
        $region51: #{tpu_custom_call.1} parent=43 // pred_region
          %304 = dma.done [#allocation7], 2048
        $region52: #{tpu_custom_call.1} parent=43 // pred_fallthru
          _
        // Predicated region
        $region53: #{tpu_custom_call.1} parent=43 // pred_check
          %p305 = pneg %p107
        $region54: #{tpu_custom_call.1} parent=43 // pred_check_branch
          %307 = sbr.rel (%p305) target = $region56
        $region55: #{tpu_custom_call.1} parent=43 // pred_region
          %308 = dma.done [#allocation7], 2048
        $region56: #{tpu_custom_call.1} parent=43 // pred_fallthru
          _
        // Predicated region
        $region57: #{tpu_custom_call.1} parent=43 // pred_check
          %p309 = pneg %p149
        $region58: #{tpu_custom_call.1} parent=43 // pred_check_branch
          %311 = sbr.rel (%p309) target = $region60
        $region59: #{tpu_custom_call.1} parent=43 // pred_region
          %312 = dma.done [#allocation10], 2048
        $region60: #{tpu_custom_call.1} parent=43 // pred_fallthru
          _
        %s313 = sand.u32 %s47, 1
        %s314 = scalar_lea.sflag [#allocation4], %s313
        %s315 = sand.u32 %s47, 1
        %s316 = smul.addr %s315, 16
        %s317 = scalar_lea.vmem [#allocation3], %s316
        %p318 = pneg %p60
        %p319 = pneg %p57
        %p320 = pneg %p86
        %p321 = pneg %p83
        %p322 = pneg %p107
        %p323 = pneg %p104
        %p324 = pneg %p128
        %p325 = pneg %p125
        %p326 = pneg %p149
        %p327 = pneg %p146
        %p328 = pneg %p170
        %p329 = pneg %p167
        %p330 = pneg %p196
        %p331 = pneg %p193
        %s332 = sand.u32 %s183, 1
        %s333 = scalar_lea.sflag [#allocation5], %s332
        %s334 = sand.u32 %s183, 1
        %s335 = smul.addr %s334, 32
        %s336 = scalar_lea.vmem [#allocation11], %s335
        %s337 = smul.u32 4, %s29
        %s338 = smul.u32 16, %s30
        %s339 = smul.u32 4, %s29
        %p340 = scmp.eq.s32.totalorder %s30, 0
        // Predicated region
        $region61: #{tpu_custom_call.1} parent=43 // pred_check
          %p341 = pneg %p340
        $region62: #{tpu_custom_call.1} parent=43 // pred_check_branch
          %343 = sbr.rel (%p341) target = $region64
        $region63: #{tpu_custom_call.1} parent=43 // pred_region
          %344 = vst [vmem:[#allocation2] sm:$0xff] 0.0
          %345 = vst [vmem:[#allocation2 + $0x8] sm:$0xff] 0.0
          %346 = vst [vmem:[#allocation2 + $0x10] sm:$0xff] 0.0
          %347 = vst [vmem:[#allocation2 + $0x18] sm:$0xff] 0.0
        $region64: #{tpu_custom_call.1} parent=43 // pred_fallthru
          _
        %v348 = vld [vmem:[#allocation2] sm:$0xff]
        %v349 = vld [vmem:[#allocation2 + $0x8] sm:$0xff]
        %v350 = vld [vmem:[#allocation2 + $0x10] sm:$0xff]
        %v351 = vld [vmem:[#allocation2 + $0x18] sm:$0xff]
        %v352 = vld [vmem:[%s296] sm:$0xf]
        %v353 = vld [vmem:[%s296 + $0x4] sm:$0xf]
        %v354 = vld [vmem:[%s296 + $0x8] sm:$0xf]
        %v355 = vld [vmem:[%s296 + $0xc] sm:$0xf]
        %v356 = vunpack.c.l.bf16 %v352
        %v357 = vunpack.c.l.bf16 %v353
        %v358 = vunpack.c.l.bf16 %v354
        %v359 = vunpack.c.l.bf16 %v355
        %v360 = vld [vmem:[#allocation6] sm:$0xff]
        %v361 = vld [vmem:[#allocation6 + $0x8] sm:$0xff]
        %v362 = vld [vmem:[#allocation6 + $0x10] sm:$0xff]
        %v363 = vld [vmem:[#allocation6 + $0x18] sm:$0xff]
        %v364 = vld [vmem:[#allocation6 + $0x20] sm:$0xff]
        %v365 = vld [vmem:[#allocation6 + $0x28] sm:$0xff]
        %v366 = vld [vmem:[#allocation6 + $0x30] sm:$0xff]
        %v367 = vld [vmem:[#allocation6 + $0x38] sm:$0xff]
        %v368 = vld [vmem:[#allocation6 + $0x40] sm:$0xff]
        %v369 = vld [vmem:[#allocation6 + $0x48] sm:$0xff]
        %v370 = vld [vmem:[#allocation6 + $0x50] sm:$0xff]
        %v371 = vld [vmem:[#allocation6 + $0x58] sm:$0xff]
        %v372 = vld [vmem:[#allocation6 + $0x60] sm:$0xff]
        %v373 = vld [vmem:[#allocation6 + $0x68] sm:$0xff]
        %v374 = vld [vmem:[#allocation6 + $0x70] sm:$0xff]
        %v375 = vld [vmem:[#allocation6 + $0x78] sm:$0xff]
        %376 = vmatprep.subr.mxu0 0.0
        %377 = vmatpush1.msra.mxu0 %v360
        %378 = vmatprep.subr.mxu0 0.0
        %379 = vmatpush1.msra.mxu0 %v361
        %380 = vmatprep.subr.mxu0 0.0
        %381 = vmatpush1.msra.mxu0 %v362
        %382 = vmatprep.subr.mxu0 0.0
        %383 = vmatpush1.msra.mxu0 %v363
        %384 = vmatprep.subr.mxu0 0.0
        %385 = vmatpush1.msra.mxu0 %v364
        %386 = vmatprep.subr.mxu0 0.0
        %387 = vmatpush1.msra.mxu0 %v365
        %388 = vmatprep.subr.mxu0 0.0
        %389 = vmatpush1.msra.mxu0 %v366
        %390 = vmatprep.subr.mxu0 0.0
        %391 = vmatpush1.msra.mxu0 %v367
        %392 = vmatprep.subr.mxu0 0.0
        %393 = vmatpush1.msra.mxu0 %v368
        %394 = vmatprep.subr.mxu0 0.0
        %395 = vmatpush1.msra.mxu0 %v369
        %396 = vmatprep.subr.mxu0 0.0
        %397 = vmatpush1.msra.mxu0 %v370
        %398 = vmatprep.subr.mxu0 0.0
        %399 = vmatpush1.msra.mxu0 %v371
        %400 = vmatprep.subr.mxu0 0.0
        %401 = vmatpush1.msra.mxu0 %v372
        %402 = vmatprep.subr.mxu0 0.0
        %403 = vmatpush1.msra.mxu0 %v373
        %404 = vmatprep.subr.mxu0 0.0
        %405 = vmatpush1.msra.mxu0 %v374
        %406 = vmatprep.subr.mxu0 0.0
        %407 = vmatpush1.msra.mxu0 %v375
        %408 = vmatprep.subr.mxu0 0.0
        %409 = vmatpush1.msra.mxu0 0.0
        %410 = vmatprep.subr.mxu0 0.0
        %411 = vmatpush1.msra.mxu0 0.0
        %412 = vmatprep.subr.mxu0 0.0
        %413 = vmatpush1.msra.mxu0 0.0
        %414 = vmatprep.subr.mxu0 0.0
        %415 = vmatpush1.msra.mxu0 0.0
        %416 = vmatprep.subr.mxu0 0.0
        %417 = vmatpush1.msra.mxu0 0.0
        %418 = vmatprep.subr.mxu0 0.0
        %419 = vmatpush1.msra.mxu0 0.0
        %420 = vmatprep.subr.mxu0 0.0
        %421 = vmatpush1.msra.mxu0 0.0
        %422 = vmatprep.subr.mxu0 0.0
        %423 = vmatpush1.msra.mxu0 0.0
        %424 = vmatprep.subr.mxu0 0.0
        %425 = vmatpush1.msra.mxu0 0.0
        %426 = vmatprep.subr.mxu0 0.0
        %427 = vmatpush1.msra.mxu0 0.0
        %428 = vmatprep.subr.mxu0 0.0
        %429 = vmatpush1.msra.mxu0 0.0
        %430 = vmatprep.subr.mxu0 0.0
        %431 = vmatpush1.msra.mxu0 0.0
        %432 = vmatprep.subr.mxu0 0.0
        %433 = vmatpush1.msra.mxu0 0.0
        %434 = vmatprep.subr.mxu0 0.0
        %435 = vmatpush1.msra.mxu0 0.0
        %436 = vmatprep.subr.mxu0 0.0
        %437 = vmatpush1.msra.mxu0 0.0
        %438 = vmatprep.subr.mxu0 0.0
        %439 = vmatpush1.msra.mxu0 0.0
        %440 = vmatprep.mubr.f32.mxu0 0.0
        %441 = vmatmul.mubr.f32.gmra.mrb[0].mxu0 %v356
        %v442 = vpop.f32.mrb[0].mxu0
        %v443 = vadd.f32 0.0, %v442
        %v444 = vpop.f32.mrb[0].mxu0
        %445 = vmatprep.mubr.f32.mxu0 0.0
        %446 = vmatmul.mubr.f32.gmra.mrb[0].mxu0 %v357
        %v447 = vpop.f32.mrb[0].mxu0
        %v448 = vadd.f32 0.0, %v447
        %v449 = vpop.f32.mrb[0].mxu0
        %450 = vmatprep.mubr.f32.mxu0 0.0
        %451 = vmatmul.mubr.f32.gmra.mrb[0].mxu0 %v358
        %v452 = vpop.f32.mrb[0].mxu0
        %v453 = vadd.f32 0.0, %v452
        %v454 = vpop.f32.mrb[0].mxu0
        %455 = vmatprep.mubr.f32.mxu0 0.0
        %456 = vmatmul.mubr.f32.gmra.mrb[0].mxu0 %v359
        %v457 = vpop.f32.mrb[0].mxu0
        %v458 = vadd.f32 0.0, %v457
        %v459 = vpop.f32.mrb[0].mxu0
        %460 = vdwg.mxu0
        %v461 = vadd.f32 %v348, %v443
        %v462 = vadd.f32 %v349, %v448
        %v463 = vadd.f32 %v350, %v453
        %v464 = vadd.f32 %v351, %v458
        %465 = vst [vmem:[#allocation2] sm:$0xff] %v461
        %466 = vst [vmem:[#allocation2 + $0x8] sm:$0xff] %v462
        %467 = vst [vmem:[#allocation2 + $0x10] sm:$0xff] %v463
        %468 = vst [vmem:[#allocation2 + $0x18] sm:$0xff] %v464
        // Predicated region
        $region65: #{tpu_custom_call.1} parent=43 // pred_check
          %p469 = pneg %p340
        $region66: #{tpu_custom_call.1} parent=43 // pred_check_branch
          %471 = sbr.rel (%p469) target = $region68
        $region67: #{tpu_custom_call.1} parent=43 // pred_region
          %v472 = vld [vmem:[#allocation2] sm:$0xff]
          %v473 = vld [vmem:[#allocation2 + $0x8] sm:$0xff]
          %v474 = vld [vmem:[#allocation2 + $0x10] sm:$0xff]
          %v475 = vld [vmem:[#allocation2 + $0x18] sm:$0xff]
          %v476 = vld [vmem:[#allocation8] sm:$0xff]
          %v477 = vld [vmem:[#allocation8 + $0x8] sm:$0xff]
          %v478 = vld [vmem:[#allocation8 + $0x10] sm:$0xff]
          %v479 = vld [vmem:[#allocation8 + $0x18] sm:$0xff]
          %v480 = vld [vmem:[#allocation8 + $0x20] sm:$0xff]
          %v481 = vld [vmem:[#allocation8 + $0x28] sm:$0xff]
          %v482 = vld [vmem:[#allocation8 + $0x30] sm:$0xff]
          %v483 = vld [vmem:[#allocation8 + $0x38] sm:$0xff]
          %v484 = vld [vmem:[#allocation8 + $0x40] sm:$0xff]
          %v485 = vld [vmem:[#allocation8 + $0x48] sm:$0xff]
          %v486 = vld [vmem:[#allocation8 + $0x50] sm:$0xff]
          %v487 = vld [vmem:[#allocation8 + $0x58] sm:$0xff]
          %v488 = vld [vmem:[#allocation8 + $0x60] sm:$0xff]
          %v489 = vld [vmem:[#allocation8 + $0x68] sm:$0xff]
          %v490 = vld [vmem:[#allocation8 + $0x70] sm:$0xff]
          %v491 = vld [vmem:[#allocation8 + $0x78] sm:$0xff]
          %v492 = vld [vmem:[%s3] sm:$0x1]
          %v494 = vlaneseq
          %v495 = vshrl.u32 %v494, 7
          %v496 = vsub.s32 0, %v495
          %v497 = vrot.slane %v492, %v496
          %499 = vmatprep.subr.mxu0 0.0
          %500 = vmatpush1.msra.mxu0 %v476
          %501 = vmatprep.subr.mxu0 0.0
          %502 = vmatpush1.msra.mxu0 %v477
          %503 = vmatprep.subr.mxu0 0.0
          %504 = vmatpush1.msra.mxu0 %v478
          %505 = vmatprep.subr.mxu0 0.0
          %506 = vmatpush1.msra.mxu0 %v479
          %507 = vmatprep.subr.mxu0 0.0
          %508 = vmatpush1.msra.mxu0 %v480
          %509 = vmatprep.subr.mxu0 0.0
          %510 = vmatpush1.msra.mxu0 %v481
          %511 = vmatprep.subr.mxu0 0.0
          %512 = vmatpush1.msra.mxu0 %v482
          %513 = vmatprep.subr.mxu0 0.0
          %514 = vmatpush1.msra.mxu0 %v483
          %515 = vmatprep.subr.mxu0 0.0
          %516 = vmatpush1.msra.mxu0 %v484
          %517 = vmatprep.subr.mxu0 0.0
          %518 = vmatpush1.msra.mxu0 %v485
          %519 = vmatprep.subr.mxu0 0.0
          %520 = vmatpush1.msra.mxu0 %v486
          %521 = vmatprep.subr.mxu0 0.0
          %522 = vmatpush1.msra.mxu0 %v487
          %523 = vmatprep.subr.mxu0 0.0
          %524 = vmatpush1.msra.mxu0 %v488
          %525 = vmatprep.subr.mxu0 0.0
          %526 = vmatpush1.msra.mxu0 %v489
          %527 = vmatprep.subr.mxu0 0.0
          %528 = vmatpush1.msra.mxu0 %v490
          %529 = vmatprep.subr.mxu0 0.0
          %530 = vmatpush1.msra.mxu0 %v491
          %531 = vmatprep.subr.mxu0 0.0
          %532 = vmatpush1.msra.mxu0 0.0
          %533 = vmatprep.subr.mxu0 0.0
          %534 = vmatpush1.msra.mxu0 0.0
          %535 = vmatprep.subr.mxu0 0.0
          %536 = vmatpush1.msra.mxu0 0.0
          %537 = vmatprep.subr.mxu0 0.0
          %538 = vmatpush1.msra.mxu0 0.0
          %539 = vmatprep.subr.mxu0 0.0
          %540 = vmatpush1.msra.mxu0 0.0
          %541 = vmatprep.subr.mxu0 0.0
          %542 = vmatpush1.msra.mxu0 0.0
          %543 = vmatprep.subr.mxu0 0.0
          %544 = vmatpush1.msra.mxu0 0.0
          %545 = vmatprep.subr.mxu0 0.0
          %546 = vmatpush1.msra.mxu0 0.0
          %547 = vmatprep.subr.mxu0 0.0
          %548 = vmatpush1.msra.mxu0 0.0
          %549 = vmatprep.subr.mxu0 0.0
          %550 = vmatpush1.msra.mxu0 0.0
          %551 = vmatprep.subr.mxu0 0.0
          %552 = vmatpush1.msra.mxu0 0.0
          %553 = vmatprep.subr.mxu0 0.0
          %554 = vmatpush1.msra.mxu0 0.0
          %555 = vmatprep.subr.mxu0 0.0
          %556 = vmatpush1.msra.mxu0 0.0
          %557 = vmatprep.subr.mxu0 0.0
          %558 = vmatpush1.msra.mxu0 0.0
          %559 = vmatprep.subr.mxu0 0.0
          %560 = vmatpush1.msra.mxu0 0.0
          %561 = vmatprep.subr.mxu0 0.0
          %562 = vmatpush1.msra.mxu0 0.0
          %563 = vmatprep.mubr.f32.mxu0 0.0
          %564 = vmatmul.mubr.f32.gmra.mrb[0].mxu0 %v472
          %v565 = vpop.f32.mrb[0].mxu0
          %v566 = vadd.f32 %v497, %v565
          %v567 = vpop.f32.mrb[0].mxu0
          %568 = vmatprep.mubr.f32.mxu0 0.0
          %569 = vmatmul.mubr.f32.gmra.mrb[0].mxu0 %v473
          %v570 = vpop.f32.mrb[0].mxu0
          %v571 = vadd.f32 %v497, %v570
          %v572 = vpop.f32.mrb[0].mxu0
          %573 = vmatprep.mubr.f32.mxu0 0.0
          %574 = vmatmul.mubr.f32.gmra.mrb[0].mxu0 %v474
          %v575 = vpop.f32.mrb[0].mxu0
          %v576 = vadd.f32 %v497, %v575
          %v577 = vpop.f32.mrb[0].mxu0
          %578 = vmatprep.mubr.f32.mxu0 0.0
          %579 = vmatmul.mubr.f32.gmra.mrb[0].mxu0 %v475
          %v580 = vpop.f32.mrb[0].mxu0
          %v581 = vadd.f32 %v497, %v580
          %v582 = vpop.f32.mrb[0].mxu0
          %583 = vdwg.mxu0
          %vm584 = vcmp.gt.f32.partialorder %v566, 0.0
          %vm585 = vcmp.gt.f32.partialorder %v571, 0.0
          %vm586 = vcmp.gt.f32.partialorder %v576, 0.0
          %vm587 = vcmp.gt.f32.partialorder %v581, 0.0
          %v588 = vmul.f32 %v566, 0.01
          %v589 = vmul.f32 %v571, 0.01
          %v590 = vmul.f32 %v576, 0.01
          %v591 = vmul.f32 %v581, 0.01
          %v592 = vsel %vm584, %v566, %v588
          %v593 = vsel %vm585, %v571, %v589
          %v594 = vsel %vm586, %v576, %v590
          %v595 = vsel %vm587, %v581, %v591
          %v596 = vld [vmem:[#allocation9] sm:$0xff]
          %v597 = vld [vmem:[#allocation9 + $0x8] sm:$0xff]
          %v598 = vld [vmem:[#allocation9 + $0x10] sm:$0xff]
          %v599 = vld [vmem:[#allocation9 + $0x18] sm:$0xff]
          %v600 = vld [vmem:[#allocation9 + $0x20] sm:$0xff]
          %v601 = vld [vmem:[#allocation9 + $0x28] sm:$0xff]
          %v602 = vld [vmem:[#allocation9 + $0x30] sm:$0xff]
          %v603 = vld [vmem:[#allocation9 + $0x38] sm:$0xff]
          %v604 = vld [vmem:[#allocation9 + $0x40] sm:$0xff]
          %v605 = vld [vmem:[#allocation9 + $0x48] sm:$0xff]
          %v606 = vld [vmem:[#allocation9 + $0x50] sm:$0xff]
          %v607 = vld [vmem:[#allocation9 + $0x58] sm:$0xff]
          %v608 = vld [vmem:[#allocation9 + $0x60] sm:$0xff]
          %v609 = vld [vmem:[#allocation9 + $0x68] sm:$0xff]
          %v610 = vld [vmem:[#allocation9 + $0x70] sm:$0xff]
          %v611 = vld [vmem:[#allocation9 + $0x78] sm:$0xff]
          %v612 = vld [vmem:[%s5] sm:$0x1]
          %v614 = vlaneseq
          %v615 = vshrl.u32 %v614, 7
          %v616 = vsub.s32 0, %v615
          %v617 = vrot.slane %v612, %v616
          %619 = vmatprep.subr.mxu0 0.0
          %620 = vmatpush1.msra.mxu0 %v596
          %621 = vmatprep.subr.mxu0 0.0
          %622 = vmatpush1.msra.mxu0 %v597
          %623 = vmatprep.subr.mxu0 0.0
          %624 = vmatpush1.msra.mxu0 %v598
          %625 = vmatprep.subr.mxu0 0.0
          %626 = vmatpush1.msra.mxu0 %v599
          %627 = vmatprep.subr.mxu0 0.0
          %628 = vmatpush1.msra.mxu0 %v600
          %629 = vmatprep.subr.mxu0 0.0
          %630 = vmatpush1.msra.mxu0 %v601
          %631 = vmatprep.subr.mxu0 0.0
          %632 = vmatpush1.msra.mxu0 %v602
          %633 = vmatprep.subr.mxu0 0.0
          %634 = vmatpush1.msra.mxu0 %v603
          %635 = vmatprep.subr.mxu0 0.0
          %636 = vmatpush1.msra.mxu0 %v604
          %637 = vmatprep.subr.mxu0 0.0
          %638 = vmatpush1.msra.mxu0 %v605
          %639 = vmatprep.subr.mxu0 0.0
          %640 = vmatpush1.msra.mxu0 %v606
          %641 = vmatprep.subr.mxu0 0.0
          %642 = vmatpush1.msra.mxu0 %v607
          %643 = vmatprep.subr.mxu0 0.0
          %644 = vmatpush1.msra.mxu0 %v608
          %645 = vmatprep.subr.mxu0 0.0
          %646 = vmatpush1.msra.mxu0 %v609
          %647 = vmatprep.subr.mxu0 0.0
          %648 = vmatpush1.msra.mxu0 %v610
          %649 = vmatprep.subr.mxu0 0.0
          %650 = vmatpush1.msra.mxu0 %v611
          %651 = vmatprep.subr.mxu0 0.0
          %652 = vmatpush1.msra.mxu0 0.0
          %653 = vmatprep.subr.mxu0 0.0
          %654 = vmatpush1.msra.mxu0 0.0
          %655 = vmatprep.subr.mxu0 0.0
          %656 = vmatpush1.msra.mxu0 0.0
          %657 = vmatprep.subr.mxu0 0.0
          %658 = vmatpush1.msra.mxu0 0.0
          %659 = vmatprep.subr.mxu0 0.0
          %660 = vmatpush1.msra.mxu0 0.0
          %661 = vmatprep.subr.mxu0 0.0
          %662 = vmatpush1.msra.mxu0 0.0
          %663 = vmatprep.subr.mxu0 0.0
          %664 = vmatpush1.msra.mxu0 0.0
          %665 = vmatprep.subr.mxu0 0.0
          %666 = vmatpush1.msra.mxu0 0.0
          %667 = vmatprep.subr.mxu0 0.0
          %668 = vmatpush1.msra.mxu0 0.0
          %669 = vmatprep.subr.mxu0 0.0
          %670 = vmatpush1.msra.mxu0 0.0
          %671 = vmatprep.subr.mxu0 0.0
          %672 = vmatpush1.msra.mxu0 0.0
          %673 = vmatprep.subr.mxu0 0.0
          %674 = vmatpush1.msra.mxu0 0.0
          %675 = vmatprep.subr.mxu0 0.0
          %676 = vmatpush1.msra.mxu0 0.0
          %677 = vmatprep.subr.mxu0 0.0
          %678 = vmatpush1.msra.mxu0 0.0
          %679 = vmatprep.subr.mxu0 0.0
          %680 = vmatpush1.msra.mxu0 0.0
          %681 = vmatprep.subr.mxu0 0.0
          %682 = vmatpush1.msra.mxu0 0.0
          %683 = vmatprep.mubr.f32.mxu0 0.0
          %684 = vmatmul.mubr.f32.gmra.mrb[0].mxu0 %v592
          %v685 = vpop.f32.mrb[0].mxu0
          %v686 = vadd.f32 %v617, %v685
          %v687 = vpop.f32.mrb[0].mxu0
          %688 = vmatprep.mubr.f32.mxu0 0.0
          %689 = vmatmul.mubr.f32.gmra.mrb[0].mxu0 %v593
          %v690 = vpop.f32.mrb[0].mxu0
          %v691 = vadd.f32 %v617, %v690
          %v692 = vpop.f32.mrb[0].mxu0
          %693 = vmatprep.mubr.f32.mxu0 0.0
          %694 = vmatmul.mubr.f32.gmra.mrb[0].mxu0 %v594
          %v695 = vpop.f32.mrb[0].mxu0
          %v696 = vadd.f32 %v617, %v695
          %v697 = vpop.f32.mrb[0].mxu0
          %698 = vmatprep.mubr.f32.mxu0 0.0
          %699 = vmatmul.mubr.f32.gmra.mrb[0].mxu0 %v595
          %v700 = vpop.f32.mrb[0].mxu0
          %v701 = vadd.f32 %v617, %v700
          %v702 = vpop.f32.mrb[0].mxu0
          %703 = vdwg.mxu0
          %vm704 = vcmp.gt.f32.partialorder %v686, 0.0
          %vm705 = vcmp.gt.f32.partialorder %v691, 0.0
          %vm706 = vcmp.gt.f32.partialorder %v696, 0.0
          %vm707 = vcmp.gt.f32.partialorder %v701, 0.0
          %v708 = vmul.f32 %v686, 0.01
          %v709 = vmul.f32 %v691, 0.01
          %v710 = vmul.f32 %v696, 0.01
          %v711 = vmul.f32 %v701, 0.01
          %v712 = vsel %vm704, %v686, %v708
          %v713 = vsel %vm705, %v691, %v709
          %v714 = vsel %vm706, %v696, %v710
          %v715 = vsel %vm707, %v701, %v711
          %716 = vst [vmem:[%s336] sm:$0xff] %v712
          %717 = vst [vmem:[%s336 + $0x8] sm:$0xff] %v713
          %718 = vst [vmem:[%s336 + $0x10] sm:$0xff] %v714
          %719 = vst [vmem:[%s336 + $0x18] sm:$0xff] %v715
        $region68: #{tpu_custom_call.1} parent=43 // pred_fallthru
          _
        %s720 = sand.u32 %s183, 1
        %s721 = scalar_lea.sflag [#allocation5], %s720
        %s722 = sand.u32 %s183, 1
        %s723 = smul.addr %s722, 32
        %s724 = scalar_lea.vmem [#allocation11], %s723
        // Predicated region
        $region69: #{tpu_custom_call.1} parent=43 // pred_check
          %p725 = pneg %p193
        $region70: #{tpu_custom_call.1} parent=43 // pred_check_branch
          %727 = sbr.rel (%p725) target = $region72
        $region71: #{tpu_custom_call.1} parent=43 // pred_region
          %s728 = smul.u32 4, %s29
          %s730 = ssub.s32 512, 512
          %731 = vsyncadd %s721, %s730
          %s732 = smul.addr %s728, 128
          %s733 = scalar_lea.hbm %s6, %s732
          %s734 = sshll.u32 %s724, 4
          %s735 = int_to_ptr.vmem [resolvable:$true] %s734
          %740 = dma.vmem_to_hbm [thread:$0]  %s735, 512, %s733, %s721, 128, 128, 8
        $region72: #{tpu_custom_call.1} parent=43 // pred_fallthru
          _
      $region44: #{tpu_custom_call.1} parent=5 // pred_fallthru
        _
      %p741 = scmp.le.s32.totalorder 2, %s20
      // Predicated region
      $region73: #{tpu_custom_call.1} parent=5 // pred_check
        %p742 = pneg %p741
      $region74: #{tpu_custom_call.1} parent=5 // pred_check_branch
        %744 = sbr.rel (%p742) target = $region76
      $region75: #{tpu_custom_call.1} parent=5 // pred_region
        %s745 = ssub.s32 %s20, 2
        // Predicated region
        $region77: #{tpu_custom_call.1} parent=75 // pred_check
          %p746 = pneg %p199
        $region78: #{tpu_custom_call.1} parent=75 // pred_check_branch
          %748 = sbr.rel (%p746) target = $region80
        $region79: #{tpu_custom_call.1} parent=75 // pred_region
          %s749 = sand.u32 %s184, 1
          %s750 = scalar_lea.sflag [#allocation5], %s749
          %s751 = sand.u32 %s184, 1
          %s752 = smul.addr %s751, 32
          %s753 = scalar_lea.vmem [#allocation11], %s752
          %754 = dma.done %s750, 512
        $region80: #{tpu_custom_call.1} parent=75 // pred_fallthru
          _
      $region76: #{tpu_custom_call.1} parent=5 // pred_fallthru
        _
    $region6: #{tpu_custom_call.1} parent=1 // loop_footer
      %s24 = sadd.s32 1, %s20
    $region7: #{tpu_custom_call.1} parent=1 // loop_footer_branch
      %19 = sbr.rel target = $region3
    $region8: #{tpu_custom_call.1} parent=1 // loop_exit
      _
    %755 = vsyncpa [#allocation4], 1
    %s756 = scalar_lea.sflag [#allocation4], 1
    %757 = vsyncpa %s756, 1
    %758 = vsyncpa [#allocation7], 1
    %759 = vsyncpa [#allocation10], 1
    %760 = vsyncpa [#allocation5], 1
    %s761 = scalar_lea.sflag [#allocation5], 1
    %762 = vsyncpa %s761, 1

</llo_original>
